<compile_context>
chip_gen: v6e
topology: v6e:2x2x1
jax: 0.10.0
libtpu: 0.0.40
codegen_flags: <defaults>
</compile_context>

<pallas_src>
import functools

import jax
import jax.numpy as jnp
from jax import lax
from jax.experimental import pallas as pl
from jax.experimental.pallas import tpu as pltpu

EPS = 1e-8  # matches nn.GroupNorm(..., eps=1e-08)


def _rup(c, m=128):
    return ((c + m - 1) // m) * m


def _pad_to(a, shape):
    return jnp.pad(a, [(0, s - d) for d, s in zip(a.shape, shape)])


def _prelu(v, a):
    return jnp.where(v >= 0, v, a * v)


def _normalize(v, inv_count, pad_ratio):
    # GroupNorm core (affine folded into downstream weights).  Two-pass
    # moments; padded channels hold exact zeros, so (v - mu) equals -mu there
    # and their contribution (pad_ratio * mu^2) is subtracted from the
    # variance.  inv_count uses the TRUE (unpadded) element count.
    mu = jnp.sum(v) * inv_count
    c = v - mu
    var = jnp.sum(c * c) * inv_count - pad_ratio * mu * mu
    var = jnp.maximum(var, 0.0)
    return c * lax.rsqrt(var + EPS)


# --------------------------- prologue kernel ---------------------------------
def _prologue_kernel(x_ref, wbn_ref, bbn_ref, o_ref, *,
                     inv_count, pad_ratio, compute_dtype):
    """Input GroupNorm (affine folded into w_bn/b_bn) + bottleneck 1x1 conv."""
    z = _normalize(x_ref[...].astype(jnp.float32), inv_count, pad_ratio)
    o_ref[...] = (jnp.dot(z.astype(compute_dtype), wbn_ref[...],
                          preferred_element_type=jnp.float32)
                  + bbn_ref[...]).astype(o_ref.dtype)


# ----------------------------- main TCN kernel -------------------------------
def _tcn_kernel(
    xbn_ref,                      # (rows, Cb) f32 — bottlenecked input (prologue out)
    w1_ref, b1_ref,               # (Cb, Hh) bf16, (1, Hh) f32
    wd_ref, bd_ref, rh_ref,       # (K, Hh) f32 (g1 folded), (1, Hh) f32, (1, Hh) halo fill
    wrs_ref, brs_ref,             # (Hh, 2*Cb) bf16 (g2 folded, res||skip fused), (1, 2*Cb) f32
    w_out_ref, b_out_ref,         # (Cb, Co) bf16, (1, Co) f32
    prelu_ref, dil_ref,           # SMEM (NB+1,) f32, (NB,) i32
    o_ref,                        # (rows, Co)
    x_acc, skip_acc, pad_buf,     # VMEM scratch: (rows, Cb) x2 f32, (T+2*halo, Hh) f32
    *, num_blocks, batch_tile, seq_len, halo,
    inv_count_hid, pad_ratio_hid, compute_dtype,
):
    i = pl.program_id(1)          # TCN block index ("arbitrary" grid axis)
    T = seq_len
    Cb = x_acc.shape[1]
    Hh = pad_buf.shape[1]

    @pl.when(i == 0)
    def _():
        x_acc[...] = xbn_ref[...].astype(jnp.float32)
        skip_acc[...] = jnp.zeros_like(skip_acc)

    a = prelu_ref[i]              # single PReLU parameter per block (used twice,
                                  # matching nn.PReLU() shared inside the block)
    d = dil_ref[i]                # this block's dilation

    # (1) 1x1 conv -> hidden channels (MXU: bf16 operands, f32 accumulation).
    h = jnp.dot(x_acc[...].astype(compute_dtype), w1_ref[...],
                preferred_element_type=jnp.float32) + b1_ref[...]

    # Halo rows hold -be1/g1 so that the folded GN1 affine reproduces the
    # reference's zero padding of the depthwise input.  Only the two halo
    # bands are written (never a full-buffer zero); the center is rewritten
    # per sample below.
    halo_fill = jnp.broadcast_to(rh_ref[...], (halo, Hh))
    pad_buf[pl.ds(0, halo), :] = halo_fill
    pad_buf[pl.ds(halo + T, halo), :] = halo_fill

    wd0 = wd_ref[0]
    wd1 = wd_ref[1]
    wd2 = wd_ref[2]

    # (2) per-sample: PReLU -> GN1 core -> depthwise dilated conv (K=3, 3
    # slice-MACs, no rolls/masks) -> PReLU -> GN2 core.  Static unroll over
    # the batch tile; matmuls stay batched over all rows.
    z2_parts = []
    for s in range(batch_tile):
        row = s * T
        zs = _normalize(_prelu(h[row:row + T], a), inv_count_hid, pad_ratio_hid)
        pad_buf[pl.ds(halo, T), :] = zs                    # 8-aligned center store
        ys = wd1 * zs + bd_ref[...]                        # center tap (+ folded be1)
        ys = ys + wd0 * pad_buf[pl.ds(halo - d, T), :]     # left tap  (offset -d)
        ys = ys + wd2 * pad_buf[pl.ds(halo + d, T), :]     # right tap (offset +d)
        z2_parts.append(_normalize(_prelu(ys, a), inv_count_hid, pad_ratio_hid))
    z2 = z2_parts[0] if batch_tile == 1 else jnp.concatenate(z2_parts, axis=0)

    # (3) fused residual || skip 1x1 conv: ONE (Hh, 2*Cb) matmul, then split.
    rs = jnp.dot(z2.astype(compute_dtype), wrs_ref[...],
                 preferred_element_type=jnp.float32) + brs_ref[...]
    x_acc[...] = x_acc[...] + rs[:, :Cb]
    skip_acc[...] = skip_acc[...] + rs[:, Cb:]

    # (4) last block: output PReLU + 1x1 conv, lane-dense (rows, Co) store.
    @pl.when(i == num_blocks - 1)
    def _():
        so = _prelu(skip_acc[...], prelu_ref[num_blocks])
        out = jnp.dot(so.astype(compute_dtype), w_out_ref[...],
                      preferred_element_type=jnp.float32) + b_out_ref[...]
        o_ref[...] = out.astype(o_ref.dtype)


# -------------------------------- wrapper -------------------------------------
def temporal_conv_net(x_nct, params, dilations, kernel_size,
                      compute_dtype=jnp.bfloat16, batch_tile=None):
    """x_nct: (B, C_in, T) like PyTorch.  Returns (B, C_out, T)."""
    # padding == dilation preserves T only for K == 3 (needed for the residual add)
    assert kernel_size == 3
    B, C_in, T = x_nct.shape
    assert T % 8 == 0, "sequence length must be a multiple of 8"
    NB = len(dilations)
    C_bt, H = params["w1"].shape[1], params["w1"].shape[2]
    C_out = params["w_out"].shape[1]
    d_max = int(max(dilations))
    halo = ((d_max + 7) // 8) * 8           # 8-aligned halo for the depthwise scratch

    Ci, Cb, Hh, Co = _rup(C_in), _rup(C_bt), _rup(H), _rup(C_out)
    f32 = jnp.float32

    # ---- fold GroupNorm affines into adjacent linear ops (wrapper time) ----
    g_in = params["g_in"].astype(f32)                                   # (1, C_in)
    b_in = params["b_in"].astype(f32)
    w_bn_f = params["w_bn"].astype(f32) * g_in.reshape(C_in, 1)         # (C_in, C_bt)
    b_bn_f = params["b_bn"].astype(f32) + b_in @ params["w_bn"].astype(f32)

    g1, be1 = params["g1"].astype(f32), params["be1"].astype(f32)       # (NB, H)
    wd, bd = params["wd"].astype(f32), params["bd"].astype(f32)         # (NB, K, H), (NB, H)
    wd_f = wd * g1[:, None, :]
    bd_f = bd + wd.sum(axis=1) * be1
    # halo fill value -be1/g1 (exact when g1 != 0; degenerate g1 == 0 -> 0).
    safe_g1 = jnp.where(g1 == 0, 1.0, g1)
    r_halo = jnp.where(g1 == 0, 0.0, -be1 / safe_g1)

    g2, be2 = params["g2"].astype(f32), params["be2"].astype(f32)       # (NB, H)
    wr, ws = params["wr"].astype(f32), params["ws"].astype(f32)         # (NB, H, C_bt)
    wr_f = wr * g2[:, :, None]
    ws_f = ws * g2[:, :, None]
    br_f = params["br"].astype(f32) + jnp.einsum("nh,nhc->nc", be2, wr)
    bs_f = params["bs"].astype(f32) + jnp.einsum("nh,nhc->nc", be2, ws)

    # ---- pad to lane-dense shapes; fuse residual||skip along the N axis ----
    w1 = _pad_to(params["w1"].astype(f32), (NB, Cb, Hh)).astype(compute_dtype)
    b1 = _pad_to(params["b1"].astype(f32), (NB, Hh)).reshape(NB, 1, Hh)
    wd_p = _pad_to(wd_f, (NB, kernel_size, Hh))
    bd_p = _pad_to(bd_f, (NB, Hh)).reshape(NB, 1, Hh)
    rh_p = _pad_to(r_halo, (NB, Hh)).reshape(NB, 1, Hh)
    w_rs = jnp.concatenate([_pad_to(wr_f, (NB, Hh, Cb)),
                            _pad_to(ws_f, (NB, Hh, Cb))], axis=2).astype(compute_dtype)
    b_rs = jnp.concatenate([_pad_to(br_f, (NB, Cb)),
                            _pad_to(bs_f, (NB, Cb))], axis=1).reshape(NB, 1, 2 * Cb)
    w_out = _pad_to(params["w_out"].astype(f32), (Cb, Co)).astype(compute_dtype)
    b_out = _pad_to(params["b_out"].astype(f32), (1, Co))
    w_bn_p = _pad_to(w_bn_f, (Ci, Cb)).astype(compute_dtype)
    b_bn_p = _pad_to(b_bn_f, (1, Cb))
    prelu_v = params["prelu"].reshape(-1).astype(f32)                   # (NB + 1,)
    dil = jnp.asarray(dilations, jnp.int32)                             # (NB,)

    # ---- generation-aware VMEM limit --------------------------------------
    try:
        vmem_cap = int(pltpu.get_tpu_info().vmem_capacity_bytes)
    except Exception:  # pragma: no cover - conservative fallback
        vmem_cap = 64 * 1024 * 1024
    vmem_limit = max(32 * 1024 * 1024, min(int(vmem_cap * 0.9), 96 * 1024 * 1024))

    # ---- batch tiling to amortize per-block weight streaming ---------------
    if batch_tile is None:
        row_bytes = (2 * Cb + 2 * Hh + Co) * 4      # accumulators + temps + out per row
        budget = max(1, (vmem_limit // 4) // max(T * row_bytes, 1))
        batch_tile = max(1, min(B, 8, budget))
        while B % batch_tile:
            batch_tile -= 1
    assert B % batch_tile == 0
    Bt = batch_tile
    rows = Bt * T

    # NLC layout, channels zero-padded to 128 multiples (lane-dense MXU / stores).
    x_nlc = _pad_to(jnp.transpose(x_nct, (0, 2, 1)).astype(f32), (B, T, Ci))

    # ---- prologue: input GN + bottleneck conv (per sample) ------------------
    prologue = functools.partial(
        _prologue_kernel,
        inv_count=1.0 / float(T * C_in),
        pad_ratio=float(Ci - C_in) / float(C_in),
        compute_dtype=compute_dtype)
    x_bn = pl.pallas_call(
        prologue,
        out_shape=jax.ShapeDtypeStruct((B, T, Cb), f32),
        grid_spec=pltpu.PrefetchScalarGridSpec(
            num_scalar_prefetch=0,
            grid=(B,),
            in_specs=[pl.BlockSpec((None, T, Ci), lambda b: (b, 0, 0)),
                      pl.BlockSpec((Ci, Cb), lambda b: (0, 0)),
                      pl.BlockSpec((1, Cb), lambda b: (0, 0))],
            out_specs=pl.BlockSpec((None, T, Cb), lambda b: (b, 0, 0))),
        compiler_params=pltpu.CompilerParams(
            dimension_semantics=("parallel",),
            vmem_limit_bytes=vmem_limit),
    )(x_nlc, w_bn_p, b_bn_p)
    x_bn = x_bn.reshape(B * T, Cb)      # free reshape; sample boundaries at s*T

    # ---- main TCN: grid = (B // Bt, NB), per-block weights streamed over i --
    kernel = functools.partial(
        _tcn_kernel,
        num_blocks=NB, batch_tile=Bt, seq_len=T, halo=halo,
        inv_count_hid=1.0 / float(T * H),
        pad_ratio_hid=float(Hh - H) / float(H),
        compute_dtype=compute_dtype)

    def pb_spec(arr):   # stacked along NB; streamed (double-buffered) per step i
        nd = arr.ndim
        return pl.BlockSpec((None,) + arr.shape[1:],
                            lambda b, i, _nd=nd: (i,) + (0,) * (_nd - 1))

    def sh_spec(arr):   # shared, fetched once
        nd = arr.ndim
        return pl.BlockSpec(arr.shape, lambda b, i, _nd=nd: (0,) * _nd)

    in_specs = (
        [pl.BlockSpec((rows, Cb), lambda b, i: (b, 0))]                 # bottlenecked x
        + [pb_spec(a) for a in (w1, b1, wd_p, bd_p, rh_p, w_rs, b_rs)]
        + [sh_spec(w_out), sh_spec(b_out)]
        + [pl.BlockSpec(memory_space=pltpu.MemorySpace.SMEM),           # PReLU scalars
           pl.BlockSpec(memory_space=pltpu.MemorySpace.SMEM)])          # dilations

    out_flat = pl.pallas_call(
        kernel,
        out_shape=jax.ShapeDtypeStruct((B * T, Co), x_nct.dtype),
        grid_spec=pltpu.PrefetchScalarGridSpec(
            num_scalar_prefetch=0,
            grid=(B // Bt, NB),
            in_specs=in_specs,
            out_specs=pl.BlockSpec((rows, Co), lambda b, i: (b, 0)),
            scratch_shapes=[
                pltpu.VMEM((rows, Cb), f32),               # x accumulator
                pltpu.VMEM((rows, Cb), f32),               # skip-sum accumulator
                pltpu.VMEM((T + 2 * halo, Hh), f32),       # depthwise halo buffer
            ]),
        compiler_params=pltpu.CompilerParams(
            dimension_semantics=("parallel", "arbitrary"),
            vmem_limit_bytes=vmem_limit),
    )(x_bn, w1, b1, wd_p, bd_p, rh_p, w_rs, b_rs, w_out, b_out, prelu_v, dil)

    out = out_flat.reshape(B, T, Co)[:, :, :C_out]
    return jnp.transpose(out, (0, 2, 1)).astype(x_nct.dtype)


# ---------- pure-JAX reference (same math incl. bf16 matmul operands) ----------
def reference(x_nct, params, dilations, kernel_size, compute_dtype=jnp.bfloat16):
    x = jnp.transpose(x_nct, (0, 2, 1)).astype(jnp.float32)  # (B, T, C)

    def gn(v, gamma, beta):
        mu = jnp.mean(v, axis=(1, 2), keepdims=True)
        var = jnp.mean((v - mu) ** 2, axis=(1, 2), keepdims=True)
        return (v - mu) * lax.rsqrt(var + EPS) * gamma + beta

    def prelu(v, a):
        return jnp.where(v >= 0, v, a * v)

    def mm(a, wmat):  # bf16 operands, f32 accumulation — mirrors the kernel's MXU path
        return jnp.einsum("btc,cd->btd", a.astype(compute_dtype),
                          wmat.astype(compute_dtype),
                          preferred_element_type=jnp.float32)

    x = gn(x, params["g_in"][0], params["b_in"][0])
    x = mm(x, params["w_bn"]) + params["b_bn"][0]
    B, T, _ = x.shape
    skip_sum = jnp.zeros_like(x)
    for i, d in enumerate(dilations):
        a = params["prelu"][i, 0]
        h = mm(x, params["w1"][i]) + params["b1"][i]
        h = gn(prelu(h, a), params["g1"][i], params["be1"][i])
        hp = jnp.pad(h, ((0, 0), (d, d), (0, 0)))
        y = sum(params["wd"][i, k] * hp[:, k * d:k * d + T, :]
                for k in range(kernel_size))
        y = y + params["bd"][i]
        y = gn(prelu(y, a), params["g2"][i], params["be2"][i])
        x = x + mm(y, params["wr"][i]) + params["br"][i]
        skip_sum = skip_sum + mm(y, params["ws"][i]) + params["bs"][i]
    out = prelu(skip_sum, params["prelu"][len(dilations), 0])
    out = mm(out, params["w_out"]) + params["b_out"][0]
    return jnp.transpose(out, (0, 2, 1))


def init_params(key, C_in, C_out, C_bt, H, NB, K):
    ks = jax.random.split(key, 12)
    s = 0.1
    return {
        "g_in": jnp.ones((1, C_in), jnp.float32),
        "b_in": jnp.zeros((1, C_in), jnp.float32),
        "w_bn": jax.random.normal(ks[0], (C_in, C_bt), jnp.float32) * s,
        "b_bn": jax.random.normal(ks[1], (1, C_bt), jnp.float32) * s,
        "w1": jax.random.normal(ks[2], (NB, C_bt, H), jnp.float32) * s,
        "b1": jax.random.normal(ks[3], (NB, H), jnp.float32) * s,
        "g1": jnp.ones((NB, H), jnp.float32),
        "be1": jnp.zeros((NB, H), jnp.float32),
        "wd": jax.random.normal(ks[4], (NB, K, H), jnp.float32) * s,
        "bd": jax.random.normal(ks[5], (NB, H), jnp.float32) * s,
        "g2": jnp.ones((NB, H), jnp.float32),
        "be2": jnp.zeros((NB, H), jnp.float32),
        "wr": jax.random.normal(ks[6], (NB, H, C_bt), jnp.float32) * s,
        "br": jax.random.normal(ks[7], (NB, C_bt), jnp.float32) * s,
        "ws": jax.random.normal(ks[8], (NB, H, C_bt), jnp.float32) * s,
        "bs": jax.random.normal(ks[9], (NB, C_bt), jnp.float32) * s,
        "w_out": jax.random.normal(ks[10], (C_bt, C_out), jnp.float32) * s,
        "b_out": jax.random.normal(ks[11], (1, C_out), jnp.float32) * s,
        "prelu": jnp.full((NB + 1, 1), 0.25, jnp.float32),
    }


if __name__ == "__main__":
    B, T = 2, 16
    in_channels, out_channels = 8, 8
    bottleneck_channels, hidden_channels = 16, 32
    num_conv_blocks, num_tcn_blocks = 2, 2
    kernel_size = 3

    dilations = tuple(
        2 ** i for _ in range(num_tcn_blocks) for i in range(num_conv_blocks)
    )
    NB = len(dilations)

    key = jax.random.PRNGKey(0)
    kx, kp = jax.random.split(key)
    x = jax.random.normal(kx, (B, in_channels, T), jnp.float32)
    params = init_params(kp, in_channels, out_channels, bottleneck_channels,
                         hidden_channels, NB, kernel_size)

    out = temporal_conv_net(x, params, dilations, kernel_size)
    out = jax.block_until_ready(out)
    assert out.shape == (B, out_channels, T)

    ref = reference(x, params, dilations, kernel_size)
    max_err = float(jnp.max(jnp.abs(out - ref)))
    if not jnp.allclose(out, ref, rtol=5e-3, atol=5e-3):
        raise AssertionError(
            f"Pallas kernel does not match JAX reference (max abs err {max_err})")
    print("KERNEL_OK")
</pallas_src>

<mosaic_0001>
module attributes {stable_mosaic.version = 11 : i64} {
  func.func @_prologue_kernel(%arg0: i32, %arg1: memref<1x16x128xf32, #tpu.memory_space<vmem>>, %arg2: memref<128x128xbf16, #tpu.memory_space<vmem>>, %arg3: memref<1x128xf32, #tpu.memory_space<vmem>>, %arg4: memref<1x16x128xf32, #tpu.memory_space<vmem>>) attributes {dimension_semantics = [#tpu.dimension_semantics<parallel>], iteration_bounds = array<i64: 2>, scalar_prefetch = 0 : i64, scratch_operands = 0 : i64, tpu.core_type = #tpu.core_type<tc>, window_params = [{transform_indices = @transform_0, window_bounds = array<i64: 1, 16, 128>}, {pipeline_mode = #tpu.pipeline_mode<synchronous>, transform_indices = @transform_1, window_bounds = array<i64: 128, 128>}, {pipeline_mode = #tpu.pipeline_mode<synchronous>, transform_indices = @transform_2, window_bounds = array<i64: 1, 128>}, {transform_indices = @transform_3, window_bounds = array<i64: 1, 16, 128>}]} {
    %c0 = arith.constant 0 : index
    %c0_0 = arith.constant 0 : index
    %c0_1 = arith.constant 0 : index
    %0 = vector.load %arg1[%c0, %c0_0, %c0_1] : memref<1x16x128xf32, #tpu.memory_space<vmem>>, vector<1x16x128xf32>
    %1 = vector.shape_cast %0 : vector<1x16x128xf32> to vector<16x128xf32>
    %2 = vector.shape_cast %1 : vector<16x128xf32> to vector<1x16x128xf32>
    %cst = arith.constant dense<0.000000e+00> : vector<1xf32>
    %3 = vector.multi_reduction <add>, %2, %cst [1, 2] : vector<1x16x128xf32> to vector<1xf32>
    %4 = vector.shape_cast %3 : vector<1xf32> to vector<1x1x1xf32>
    %5 = vector.extract %4[0, 0, 0] : f32 from vector<1x1x1xf32>
    %cst_2 = arith.constant 7.812500e-03 : f32
    %6 = arith.mulf %5, %cst_2 : f32
    %7 = vector.broadcast %6 : f32 to vector<16x128xf32>
    %8 = arith.subf %1, %7 : vector<16x128xf32>
    %9 = arith.mulf %8, %8 : vector<16x128xf32>
    %10 = vector.shape_cast %9 : vector<16x128xf32> to vector<1x16x128xf32>
    %cst_3 = arith.constant dense<0.000000e+00> : vector<1xf32>
    %11 = vector.multi_reduction <add>, %10, %cst_3 [1, 2] : vector<1x16x128xf32> to vector<1xf32>
    %12 = vector.shape_cast %11 : vector<1xf32> to vector<1x1x1xf32>
    %13 = vector.extract %12[0, 0, 0] : f32 from vector<1x1x1xf32>
    %cst_4 = arith.constant 7.812500e-03 : f32
    %14 = arith.mulf %13, %cst_4 : f32
    %cst_5 = arith.constant 1.500000e+01 : f32
    %15 = arith.mulf %cst_5, %6 : f32
    %16 = arith.mulf %15, %6 : f32
    %17 = arith.subf %14, %16 : f32
    %cst_6 = arith.constant 0.000000e+00 : f32
    %18 = arith.maximumf %17, %cst_6 : f32
    %cst_7 = arith.constant 9.99999993E-9 : f32
    %19 = arith.addf %18, %cst_7 : f32
    %20 = math.rsqrt %19 : f32
    %21 = vector.broadcast %20 : f32 to vector<16x128xf32>
    %22 = arith.mulf %8, %21 : vector<16x128xf32>
    %23 = arith.truncf %22 : vector<16x128xf32> to vector<16x128xbf16>
    %c0_8 = arith.constant 0 : index
    %c0_9 = arith.constant 0 : index
    %24 = vector.load %arg2[%c0_8, %c0_9] : memref<128x128xbf16, #tpu.memory_space<vmem>>, vector<128x128xbf16>
    %cst_10 = arith.constant dense<0.000000e+00> : vector<16x128xf32>
    %25 = tpu.matmul %23, %24, %cst_10 {dimension_numbers = #tpu.dot_dimension_numbers<[1], [0], [0], [1], [0, 0, 1, 1], [], []>} : vector<16x128xbf16>, vector<128x128xbf16>, vector<16x128xf32> -> vector<16x128xf32>
    %c0_11 = arith.constant 0 : index
    %c0_12 = arith.constant 0 : index
    %26 = vector.load %arg3[%c0_11, %c0_12] : memref<1x128xf32, #tpu.memory_space<vmem>>, vector<1x128xf32>
    %27 = vector.broadcast %26 : vector<1x128xf32> to vector<16x128xf32>
    %28 = arith.addf %25, %27 : vector<16x128xf32>
    %c0_13 = arith.constant 0 : index
    %c0_14 = arith.constant 0 : index
    %c0_15 = arith.constant 0 : index
    %29 = vector.load %arg4[%c0_13, %c0_14, %c0_15] : memref<1x16x128xf32, #tpu.memory_space<vmem>>, vector<1x16x128xf32>
    %30 = vector.shape_cast %29 : vector<1x16x128xf32> to vector<16x128xf32>
    %31 = vector.shape_cast %28 : vector<16x128xf32> to vector<1x16x128xf32>
    tpu.vector_store %arg4[%c0_13, %c0_14, %c0_15], %31 {strides = array<i32>} : memref<1x16x128xf32, #tpu.memory_space<vmem>>, vector<1x16x128xf32>,
    return
  }
  func.func @transform_0(%arg0: i32) -> (i32, i32, i32) {
    %c0_i32 = arith.constant 0 : i32
    %c0_i32_0 = arith.constant 0 : i32
    %c0_i32_1 = arith.constant 0 : i32
    return %arg0, %c0_i32, %c0_i32_0 : i32, i32, i32
  }
  func.func @transform_1(%arg0: i32) -> (i32, i32) {
    %c0_i32 = arith.constant 0 : i32
    %c0_i32_0 = arith.constant 0 : i32
    %c0_i32_1 = arith.constant 0 : i32
    return %c0_i32, %c0_i32_0 : i32, i32
  }
  func.func @transform_2(%arg0: i32) -> (i32, i32) {
    %c0_i32 = arith.constant 0 : i32
    %c0_i32_0 = arith.constant 0 : i32
    %c0_i32_1 = arith.constant 0 : i32
    return %c0_i32, %c0_i32_0 : i32, i32
  }
  func.func @transform_3(%arg0: i32) -> (i32, i32, i32) {
    %c0_i32 = arith.constant 0 : i32
    %c0_i32_0 = arith.constant 0 : i32
    %c0_i32_1 = arith.constant 0 : i32
    return %arg0, %c0_i32, %c0_i32_0 : i32, i32, i32
  }
}

</mosaic_0001>

<llo_original>
// kernel: tpu_custom_call.1
$region0: #{tpu_custom_call.1}
  #allocation0 [shape = 'u32[]', space=smem, size = 0x4, offset = 0x4, fixed_abs, tag = 'smem constant byte address 0x4 - core index']
  #allocation1 [shape = 'u32[144,128]{1,0:T(1,128)}', space=vmem, size = 0x12000, scoped, tag = 'internal scratch']
  %s0 = inlined_call_operand.hbm [shape: f32[2,16,128], index: 0, kind: input, shape index: {}]
  %s1 = inlined_call_operand.hbm [shape: bf16[128,128], index: 1, kind: input, shape index: {}]
  %s2 = inlined_call_operand.vmem [shape: f32[1,128], index: 2, kind: input, shape index: {}]
  %s3 = inlined_call_operand.hbm [shape: f32[2,16,128], index: 3, kind: output, shape index: {}]
  %s4 = sld [smem:[#allocation0]]
  $region53: #{tpu_custom_call.1} parent=0
    _
  %s6 = ssub.s32 1, %s4
  %s7 = scalar_select 0, %s6, %s4
  $region1: #{tpu_custom_call.1} parent=0
    #allocation2 [shape = 'u8[16384]{0}', space=vmem, size = 0x4000, scoped, tag = 'input window, operand 0']
    #allocation3 [shape = 's32[2]{0}', space=sflag, size = 0x8, scoped, tag = 'scoped memory for tpu_custom_call.1']
    #allocation4 [shape = 's32[2]{0}', space=sflag, size = 0x8, scoped, tag = 'scoped memory for tpu_custom_call.1']
    #allocation5 [shape = 'u8[32768]{0}', space=vmem, size = 0x8000, scoped, tag = 'input window, operand 1, single buffered']
    #allocation6 [shape = 's32[1]{0}', space=sflag, size = 0x4, scoped, tag = 'scoped memory for tpu_custom_call.1']
    #allocation7 [shape = 'u8[16384]{0}', space=vmem, size = 0x4000, scoped, tag = 'output window, operand 0']
    %8 = vsyncpa [#allocation3], 0
    %s9 = scalar_lea.sflag [#allocation3], 1
    %10 = vsyncpa %s9, 0
    %11 = vsyncpa [#allocation6], 0
    %12 = vsyncpa [#allocation4], 0
    %s13 = scalar_lea.sflag [#allocation4], 1
    %14 = vsyncpa %s13, 0
    loop: start=0, step=1, limit=4
    $region2: #{tpu_custom_call.1} parent=1 // loop_pre_header
      _
    $region3: #{tpu_custom_call.1} parent=1 // loop_header
      %s16 = sphi 0, %s20
      %p17 = scmp.ge.s32.totalorder %s16, 4
      %s26 = sphi 0, %s28
      %s29 = sphi 0, %s26
      %s30 = sphi 0, %s29
      %s46 = sphi 0, %s30
      %s50 = sphi 0, %s50
      %s52 = sphi 0, %s50
      %s53 = sphi 0, %s52
      %s67 = sphi 0, %s53
      %s71 = sphi 0, %s71
      %s73 = sphi 0, %s71
      %s74 = sphi 0, %s73
      %s88 = sphi 0, %s74
      %s94 = sphi 0, %s96
      %s97 = sphi 0, %s94
      %s98 = sphi 0, %s97
      %s114 = sphi 0, %s98
    $region4: #{tpu_custom_call.1} parent=1 // loop_header_branch
      %19 = sbr.rel (%p17) target = $region8
    $region5: #{tpu_custom_call.1} parent=1 // loop_body
      %s21 = ssub.s32 %s16, 1
      %s22 = ssub.s32 %s16, 2
      %s23 = sadd.s32 %s16, 1
      %s24 = ssub.s32 %s16, %s23
      %p25 = scmp.eq.s32.totalorder %s24, 0
      %s27 = sadd.s32 %s26, 1
      %s28 = scalar_select %p25, %s26, %s27
      %p31 = pneg %p25
      %p32 = scmp.eq.s32.totalorder %s16, 1
      %p33 = por %p31, %p32
      %p34 = scmp.ne.s32.totalorder %s26, %s29
      %p35 = scmp.eq.s32.totalorder %s16, 0
      %p36 = por %p34, %p35
      %p37 = scmp.ne.s32.totalorder %s26, %s29
      %p38 = scmp.eq.s32.totalorder %s21, 1
      %p39 = por %p37, %p38
      %p40 = scmp.ne.s32.totalorder %s29, %s30
      %p41 = scmp.eq.s32.totalorder %s21, 0
      %p42 = por %p40, %p41
      %p43 = scmp.ne.s32.totalorder %s29, %s30
      %p44 = scmp.eq.s32.totalorder %s22, 1
      %p45 = por %p43, %p44
      %p47 = scmp.ne.s32.totalorder %s30, %s46
      %p48 = scmp.eq.s32.totalorder %s22, 0
      %p49 = por %p47, %p48
      %s51 = sadd.s32 %s50, 1
      %p54 = scmp.eq.s32.totalorder %s16, 1
      %p55 = scmp.ne.s32.totalorder %s50, %s52
      %p56 = scmp.eq.s32.totalorder %s16, 0
      %p57 = por %p55, %p56
      %p58 = scmp.ne.s32.totalorder %s50, %s52
      %p59 = scmp.eq.s32.totalorder %s21, 1
      %p60 = por %p58, %p59
      %p61 = scmp.ne.s32.totalorder %s52, %s53
      %p62 = scmp.eq.s32.totalorder %s21, 0
      %p63 = por %p61, %p62
      %p64 = scmp.ne.s32.totalorder %s52, %s53
      %p65 = scmp.eq.s32.totalorder %s22, 1
      %p66 = por %p64, %p65
      %p68 = scmp.ne.s32.totalorder %s53, %s67
      %p69 = scmp.eq.s32.totalorder %s22, 0
      %p70 = por %p68, %p69
      %s72 = sadd.s32 %s71, 1
      %p75 = scmp.eq.s32.totalorder %s16, 1
      %p76 = scmp.ne.s32.totalorder %s71, %s73
      %p77 = scmp.eq.s32.totalorder %s16, 0
      %p78 = por %p76, %p77
      %p79 = scmp.ne.s32.totalorder %s71, %s73
      %p80 = scmp.eq.s32.totalorder %s21, 1
      %p81 = por %p79, %p80
      %p82 = scmp.ne.s32.totalorder %s73, %s74
      %p83 = scmp.eq.s32.totalorder %s21, 0
      %p84 = por %p82, %p83
      %p85 = scmp.ne.s32.totalorder %s73, %s74
      %p86 = scmp.eq.s32.totalorder %s22, 1
      %p87 = por %p85, %p86
      %p89 = scmp.ne.s32.totalorder %s74, %s88
      %p90 = scmp.eq.s32.totalorder %s22, 0
      %p91 = por %p89, %p90
      %s92 = ssub.s32 %s16, %s23
      %p93 = scmp.eq.s32.totalorder %s92, 0
      %s95 = sadd.s32 %s94, 1
      %s96 = scalar_select %p93, %s94, %s95
      %p99 = pneg %p93
      %p100 = scmp.eq.s32.totalorder %s16, 1
      %p101 = por %p99, %p100
      %p102 = scmp.ne.s32.totalorder %s94, %s97
      %p103 = scmp.eq.s32.totalorder %s16, 0
      %p104 = por %p102, %p103
      %p105 = scmp.ne.s32.totalorder %s94, %s97
      %p106 = scmp.eq.s32.totalorder %s21, 1
      %p107 = por %p105, %p106
      %p108 = scmp.ne.s32.totalorder %s97, %s98
      %p109 = scmp.eq.s32.totalorder %s21, 0
      %p110 = por %p108, %p109
      %p111 = scmp.ne.s32.totalorder %s97, %s98
      %p112 = scmp.eq.s32.totalorder %s22, 1
      %p113 = por %p111, %p112
      %p115 = scmp.ne.s32.totalorder %s98, %s114
      %p116 = scmp.eq.s32.totalorder %s22, 0
      %p117 = por %p115, %p116
      %p118 = scmp.le.s32.totalorder 1, %s16
      %p119 = scmp.lt.s32.totalorder %s16, 3
      %p120 = pnand %p118, %p119
      %p121 = pneg %p120
      // Predicated region
      $region9: #{tpu_custom_call.1} parent=5 // pred_check
        _
      $region10: #{tpu_custom_call.1} parent=5 // pred_check_branch
        %123 = sbr.rel (%p120) target = $region12
      $region11: #{tpu_custom_call.1} parent=5 // pred_region
        %s124 = ssub.s32 %s16, 1
        // Predicated region
        $region13: #{tpu_custom_call.1} parent=11 // pred_check
          %p125 = pneg %p63
        $region14: #{tpu_custom_call.1} parent=11 // pred_check_branch
          %127 = sbr.rel (%p125) target = $region16
        $region15: #{tpu_custom_call.1} parent=11 // pred_region
          %s129 = ssub.s32 1024, 1024
          %130 = vsyncadd [#allocation6], %s129
          %s131 = sshll.u32 [#allocation5], 4
          %s132 = int_to_ptr.vmem [resolvable:$true] %s131
          %137 = dma.hbm_to_vmem [thread:$0]  %s1, 1024, %s132, [#allocation6], 64, 64, 4
        $region16: #{tpu_custom_call.1} parent=11 // pred_fallthru
          _
        // Predicated region
        $region17: #{tpu_custom_call.1} parent=11 // pred_check
          %p138 = pneg %p84
        $region18: #{tpu_custom_call.1} parent=11 // pred_check_branch
          %140 = sbr.rel (%p138) target = $region20
        $region19: #{tpu_custom_call.1} parent=11 // pred_region
          _
        $region20: #{tpu_custom_call.1} parent=11 // pred_fallthru
          _
      $region12: #{tpu_custom_call.1} parent=5 // pred_fallthru
        _
      %p141 = scmp.lt.s32.totalorder %s16, 2
      // Predicated region
      $region21: #{tpu_custom_call.1} parent=5 // pred_check
        %p142 = pneg %p141
      $region22: #{tpu_custom_call.1} parent=5 // pred_check_branch
        %144 = sbr.rel (%p142) target = $region24
      $region23: #{tpu_custom_call.1} parent=5 // pred_region
        // Predicated region
        $region25: #{tpu_custom_call.1} parent=23 // pred_check
          %p145 = pneg %p36
        $region26: #{tpu_custom_call.1} parent=23 // pred_check_branch
          %147 = sbr.rel (%p145) target = $region28
        $region27: #{tpu_custom_call.1} parent=23 // pred_region
          %s148 = sand.u32 %s26, 1
          %s149 = scalar_lea.sflag [#allocation3], %s148
          %s150 = sand.u32 %s26, 1
          %s151 = smul.addr %s150, 16
          %s152 = scalar_lea.vmem [#allocation2], %s151
          %s154 = ssub.s32 256, 256
          %155 = vsyncadd %s149, %s154
          %s156 = smul.addr %s16, 2
          %s157 = smul.addr %s156, 128
          %s158 = scalar_lea.hbm %s0, %s157
          %s159 = sshll.u32 %s152, 4
          %s160 = int_to_ptr.vmem [resolvable:$true] %s159
          %165 = dma.hbm_to_vmem [thread:$0]  %s158, 256, %s160, %s149, 128, 128, 8
        $region28: #{tpu_custom_call.1} parent=23 // pred_fallthru
          _
      $region24: #{tpu_custom_call.1} parent=5 // pred_fallthru
        _
      %p166 = scmp.le.s32.totalorder 1, %s16
      %p167 = scmp.lt.s32.totalorder %s16, 3
      %p168 = pnand %p166, %p167
      %p169 = pneg %p168
      // Predicated region
      $region29: #{tpu_custom_call.1} parent=5 // pred_check
        _
      $region30: #{tpu_custom_call.1} parent=5 // pred_check_branch
        %171 = sbr.rel (%p168) target = $region32
      $region31: #{tpu_custom_call.1} parent=5 // pred_region
        %s172 = ssub.s32 %s16, 1
        %s173 = sand.u32 %s29, 1
        %s174 = scalar_lea.sflag [#allocation3], %s173
        %s175 = sand.u32 %s29, 1
        %s176 = smul.addr %s175, 16
        %s177 = scalar_lea.vmem [#allocation2], %s176
        // Predicated region
        $region33: #{tpu_custom_call.1} parent=31 // pred_check
          %p178 = pneg %p42
        $region34: #{tpu_custom_call.1} parent=31 // pred_check_branch
          %180 = sbr.rel (%p178) target = $region36
        $region35: #{tpu_custom_call.1} parent=31 // pred_region
          %181 = dma.done %s174, 256
        $region36: #{tpu_custom_call.1} parent=31 // pred_fallthru
          _
        // Predicated region
        $region37: #{tpu_custom_call.1} parent=31 // pred_check
          %p182 = pneg %p63
        $region38: #{tpu_custom_call.1} parent=31 // pred_check_branch
          %184 = sbr.rel (%p182) target = $region40
        $region39: #{tpu_custom_call.1} parent=31 // pred_region
          %185 = dma.done [#allocation6], 1024
        $region40: #{tpu_custom_call.1} parent=31 // pred_fallthru
          _
        %s186 = sand.u32 %s29, 1
        %s187 = scalar_lea.sflag [#allocation3], %s186
        %s188 = sand.u32 %s29, 1
        %s189 = smul.addr %s188, 16
        %s190 = scalar_lea.vmem [#allocation2], %s189
        %p191 = pneg %p42
        %p192 = pneg %p39
        %p193 = pneg %p63
        %p194 = pneg %p60
        %p195 = pneg %p84
        %p196 = pneg %p81
        %p197 = pneg %p110
        %p198 = pneg %p107
        %s199 = sand.u32 %s97, 1
        %s200 = scalar_lea.sflag [#allocation4], %s199
        %s201 = sand.u32 %s97, 1
        %s202 = smul.addr %s201, 16
        %s203 = scalar_lea.vmem [#allocation7], %s202
        %v205 = vld [vmem:[%s177] sm:$0xff]
        %v206 = vld [vmem:[%s177 + $0x8] sm:$0xff]
        %v207 = vadd.f32 %v205, %v206
        %208 = vadd.xlane.f32.xlu0 %v207
        %v209 = vpop.xlane.xlu0 %208
        %v210 = vrot.slane %v209, 4
        %v211 = vadd.f32 %v209, %v210
        %v212 = vrot.slane %v211, 2
        %v213 = vadd.f32 %v211, %v212
        %v214 = vrot.slane %v213, 1
        %v215 = vadd.f32 %v213, %v214
        %s216 = vtos %v215
        %s217 = smul.f32 %s216, 0.0078125
        %v218 = vstv %s217
        %v219 = vsub.f32 %v205, %v218
        %v220 = vsub.f32 %v206, %v218
        %v221 = vmul.f32 %v219, %v219
        %v222 = vmul.f32 %v220, %v220
        %v223 = vadd.f32 %v221, %v222
        %224 = vadd.xlane.f32.xlu0 %v223
        %v225 = vpop.xlane.xlu0 %224
        %v226 = vrot.slane %v225, 4
        %v227 = vadd.f32 %v225, %v226
        %v228 = vrot.slane %v227, 2
        %v229 = vadd.f32 %v227, %v228
        %v230 = vrot.slane %v229, 1
        %v231 = vadd.f32 %v229, %v230
        %s232 = vtos %v231
        %s233 = smul.f32 %s232, 0.0078125
        %s234 = smul.f32 %s217, 15.0
        %s235 = smul.f32 %s234, %s217
        %s236 = ssub.f32 %s233, %s235
        %s237 = smax.f32 %s236, 0.0
        %s238 = sadd.f32 %s237, 1e-08
        %v239 = vstv %s238
        %v240 = vrsqrt.pop %v239
        %s241 = vtos %v240
        %v242 = vstv %s241
        %v243 = vmul.f32 %v219, %v242
        %v244 = vmul.f32 %v220, %v242
        %v245 = vpack.c.bf16 %v244, %v243
        %v246 = vld [vmem:[#allocation5] sm:$0xf]
        %v247 = vld [vmem:[#allocation5 + $0x4] sm:$0xf]
        %v248 = vld [vmem:[#allocation5 + $0x8] sm:$0xf]
        %v249 = vld [vmem:[#allocation5 + $0xc] sm:$0xf]
        %v250 = vld [vmem:[#allocation5 + $0x10] sm:$0xf]
        %v251 = vld [vmem:[#allocation5 + $0x14] sm:$0xf]
        %v252 = vld [vmem:[#allocation5 + $0x18] sm:$0xf]
        %v253 = vld [vmem:[#allocation5 + $0x1c] sm:$0xf]
        %v254 = vld [vmem:[#allocation5 + $0x20] sm:$0xf]
        %v255 = vld [vmem:[#allocation5 + $0x24] sm:$0xf]
        %v256 = vld [vmem:[#allocation5 + $0x28] sm:$0xf]
        %v257 = vld [vmem:[#allocation5 + $0x2c] sm:$0xf]
        %v258 = vld [vmem:[#allocation5 + $0x30] sm:$0xf]
        %v259 = vld [vmem:[#allocation5 + $0x34] sm:$0xf]
        %v260 = vld [vmem:[#allocation5 + $0x38] sm:$0xf]
        %v261 = vld [vmem:[#allocation5 + $0x3c] sm:$0xf]
        %v262 = vld [vmem:[%s2] sm:$0x1]
        %v264 = vlaneseq
        %v265 = vshrl.u32 %v264, 7
        %v266 = vsub.s32 0, %v265
        %v267 = vrot.slane %v262, %v266
        %v285 = vunpack.c.l.b16 %v246
        %v286 = vunpack.c.l.b16 %v247
        %v287 = vunpack.c.l.b16 %v248
        %v288 = vunpack.c.l.b16 %v249
        %v289 = vunpack.c.l.b16 %v250
        %v290 = vunpack.c.l.b16 %v251
        %v291 = vunpack.c.l.b16 %v252
        %v292 = vunpack.c.l.b16 %v253
        %v293 = vunpack.c.l.b16 %v254
        %v294 = vunpack.c.l.b16 %v255
        %v295 = vunpack.c.l.b16 %v256
        %v296 = vunpack.c.l.b16 %v257
        %v297 = vunpack.c.l.b16 %v258
        %v298 = vunpack.c.l.b16 %v259
        %v299 = vunpack.c.l.b16 %v260
        %v300 = vunpack.c.l.b16 %v261
        %v301 = vpack.c.b16 %v286, %v285
        %v302 = vpack.c.b16 %v288, %v287
        %v303 = vpack.c.b16 %v290, %v289
        %v304 = vpack.c.b16 %v292, %v291
        %v305 = vpack.c.b16 %v294, %v293
        %v306 = vpack.c.b16 %v296, %v295
        %v307 = vpack.c.b16 %v298, %v297
        %v308 = vpack.c.b16 %v300, %v299
        %317 = vmatprep.subr.bf16.mxu0 0
        %318 = vmatpush1.bf16.msra.mxu0 %v308
        %319 = vmatprep.subr.bf16.mxu0 0
        %320 = vmatpush1.bf16.msra.mxu0 %v307
        %321 = vmatprep.subr.bf16.mxu0 0
        %322 = vmatpush1.bf16.msra.mxu0 %v306
        %323 = vmatprep.subr.bf16.mxu0 0
        %324 = vmatpush1.bf16.msra.mxu0 %v305
        %325 = vmatprep.subr.bf16.mxu0 0
        %326 = vmatpush1.bf16.msra.mxu0 %v304
        %327 = vmatprep.subr.bf16.mxu0 0
        %328 = vmatpush1.bf16.msra.mxu0 %v303
        %329 = vmatprep.subr.bf16.mxu0 0
        %330 = vmatpush1.bf16.msra.mxu0 %v302
        %331 = vmatprep.subr.bf16.mxu0 0
        %332 = vmatpush1.bf16.msra.mxu0 %v301
        %333 = vmatprep.subr.bf16.mxu0 0
        %334 = vmatpush2.bf16.msra.mxu0 0
        %335 = vmatprep.subr.bf16.mxu0 0
        %336 = vmatpush2.bf16.msra.mxu0 0
        %337 = vmatprep.subr.bf16.mxu0 0
        %338 = vmatpush2.bf16.msra.mxu0 0
        %339 = vmatprep.subr.bf16.mxu0 0
        %340 = vmatpush2.bf16.msra.mxu0 0
        %341 = vmatprep.subr.bf16.mxu0 0
        %342 = vmatpush2.bf16.msra.mxu0 0
        %343 = vmatprep.subr.bf16.mxu0 0
        %344 = vmatpush2.bf16.msra.mxu0 0
        %345 = vmatprep.subr.bf16.mxu0 0
        %346 = vmatpush2.bf16.msra.mxu0 0
        %347 = vmatprep.subr.bf16.mxu0 0
        %348 = vmatpush2.bf16.msra.mxu0 0
        %349 = vmatprep.mubr.bf16.mxu0 0
        %350 = vmatmul.mubr.bf16.gmra.mxu0 %v245
        %v351 = vpop.f32.mrf.mxu0
        %v352 = vadd.f32 %v267, %v351
        %v353 = vpop.f32.mrf.mxu0
        %v354 = vpop.f32.mrf.mxu0
        %v355 = vadd.f32 %v267, %v354
        %v356 = vpop.f32.mrf.mxu0
        %357 = vdwg.mxu0
        %358 = vst [vmem:[%s203] sm:$0xff] %v352
        %359 = vst [vmem:[%s203 + $0x8] sm:$0xff] %v355
        %s360 = sand.u32 %s97, 1
        %s361 = scalar_lea.sflag [#allocation4], %s360
        %s362 = sand.u32 %s97, 1
        %s363 = smul.addr %s362, 16
        %s364 = scalar_lea.vmem [#allocation7], %s363
        // Predicated region
        $region41: #{tpu_custom_call.1} parent=31 // pred_check
          %p365 = pneg %p107
        $region42: #{tpu_custom_call.1} parent=31 // pred_check_branch
          %367 = sbr.rel (%p365) target = $region44
        $region43: #{tpu_custom_call.1} parent=31 // pred_region
          %s369 = ssub.s32 256, 256
          %370 = vsyncadd %s361, %s369
          %s371 = smul.addr %s21, 2
          %s372 = smul.addr %s371, 128
          %s373 = scalar_lea.hbm %s3, %s372
          %s374 = sshll.u32 %s364, 4
          %s375 = int_to_ptr.vmem [resolvable:$true] %s374
          %380 = dma.vmem_to_hbm [thread:$0]  %s375, 256, %s373, %s361, 128, 128, 8
        $region44: #{tpu_custom_call.1} parent=31 // pred_fallthru
          _
      $region32: #{tpu_custom_call.1} parent=5 // pred_fallthru
        _
      %p381 = scmp.le.s32.totalorder 2, %s16
      // Predicated region
      $region45: #{tpu_custom_call.1} parent=5 // pred_check
        %p382 = pneg %p381
      $region46: #{tpu_custom_call.1} parent=5 // pred_check_branch
        %384 = sbr.rel (%p382) target = $region48
      $region47: #{tpu_custom_call.1} parent=5 // pred_region
        %s385 = ssub.s32 %s16, 2
        // Predicated region
        $region49: #{tpu_custom_call.1} parent=47 // pred_check
          %p386 = pneg %p113
        $region50: #{tpu_custom_call.1} parent=47 // pred_check_branch
          %388 = sbr.rel (%p386) target = $region52
        $region51: #{tpu_custom_call.1} parent=47 // pred_region
          %s389 = sand.u32 %s98, 1
          %s390 = scalar_lea.sflag [#allocation4], %s389
          %s391 = sand.u32 %s98, 1
          %s392 = smul.addr %s391, 16
          %s393 = scalar_lea.vmem [#allocation7], %s392
          %394 = dma.done %s390, 256
        $region52: #{tpu_custom_call.1} parent=47 // pred_fallthru
          _
      $region48: #{tpu_custom_call.1} parent=5 // pred_fallthru
        _
    $region6: #{tpu_custom_call.1} parent=1 // loop_footer
      %s20 = sadd.s32 1, %s16
    $region7: #{tpu_custom_call.1} parent=1 // loop_footer_branch
      %15 = sbr.rel target = $region3
    $region8: #{tpu_custom_call.1} parent=1 // loop_exit
      _
    %395 = vsyncpa [#allocation3], 1
    %s396 = scalar_lea.sflag [#allocation3], 1
    %397 = vsyncpa %s396, 1
    %398 = vsyncpa [#allocation6], 1
    %399 = vsyncpa [#allocation4], 1
    %s400 = scalar_lea.sflag [#allocation4], 1
    %401 = vsyncpa %s400, 1

</llo_original>
